<compile_context>
chip_gen: v7x
topology: tpu7x:2x2x1
jax: 0.10.0
libtpu: 0.0.40
codegen_flags: <defaults>
</compile_context>

<pallas_src>
import functools

import jax
import jax.numpy as jnp
from jax.experimental import pallas as pl
from jax.experimental.pallas import tpu as pltpu


def _encoder_norm_kernel(alpha_ref, bias_ref, x_ref, o_ref, *, eps,
                         use_mxu_reduce):
    """LayerNormalization (scalar alpha/bias) over the last dim of a tile.

    Matches torch semantics: mean/std over dim=-1, std with Bessel's
    correction (ddof=1), eps added to std (not var):
        y = alpha * (x - mean) / (std + eps) + bias
    """
    x = x_ref[...].astype(jnp.float32)
    d = x.shape[-1]
    inv_d = jnp.float32(1.0 / d)
    # TODO(synk): torch returns NaN for the unbiased std of a single element
    # (d == 1); the max(d-1, 1) guard keeps this kernel finite instead.
    inv_dm1 = jnp.float32(1.0 / max(d - 1, 1))

    if use_mxu_reduce:
        # Small d: the cross-lane XLU reduce (not HBM) is the binding VLIW
        # slot (~7 cyc/vreg vs ~5 cyc of HBM time at d=128).  Do the row
        # reductions on the otherwise-idle MXU instead.
        ones_col = jnp.ones((d, 1), dtype=jnp.float32)

        def _row_sum(v):
            return jnp.dot(v, ones_col, preferred_element_type=jnp.float32)
    else:
        def _row_sum(v):
            return jnp.sum(v, axis=-1, keepdims=True)

    # Two-pass statistics on the VMEM-resident tile: numerically robust when
    # |mean| >> std, and still a single HBM read of the activation.
    mean = _row_sum(x) * inv_d                       # (rows, 1)
    centered = x - mean                              # (rows, d) f32
    var = _row_sum(centered * centered) * inv_dm1    # (rows, 1), unbiased
    z = jnp.sqrt(var) + jnp.float32(eps)

    # Per-row reciprocal on the EUP (separate VLIW slot) instead of a
    # per-element divide; two Newton steps restore ~f32 accuracy at (rows, 1)
    # cost, which is negligible.
    inv = pl.reciprocal(z, approx=True)
    inv = inv * (jnp.float32(2.0) - z * inv)
    inv = inv * (jnp.float32(2.0) - z * inv)

    # Fold scalar alpha and the per-row inverse std into one per-row scale:
    # one multiply + one add per element.
    scale = alpha_ref[0] * inv                       # (rows, 1)
    o_ref[...] = (centered * scale + bias_ref[0]).astype(o_ref.dtype)


def _round_up(n, m):
    return ((n + m - 1) // m) * m


def _vmem_capacity_bytes():
    """Physical VMEM of the current generation; conservative fallback."""
    try:
        return int(pltpu.get_tpu_info().vmem_capacity_bytes)
    except Exception:
        return 64 << 20  # v7x-sized: safe on every generation


def _choose_rows_per_block(rows, d, target_block_bytes, mult, min_grid_steps):
    """Row tile sized to ~target_block_bytes of f32, rounded to the sublane
    packing, capped so the grid has >= min_grid_steps steps (megacore +
    pipeline overlap), and rebalanced so the masked tail of the last block is
    tiny."""
    row_bytes_f32 = max(d * 4, 1)
    rpb = max(mult, (target_block_bytes // row_bytes_f32) // mult * mult)
    # At least min_grid_steps grid iterations.
    rpb = min(rpb, max(mult, _round_up(-(-rows // min_grid_steps), mult)))
    # Never larger than the (rounded-up) number of rows.
    rpb = min(rpb, _round_up(max(rows, 1), mult))
    # Rebalance across the resulting number of blocks so the never-written
    # tail of the last block is at most ~mult rows per step.
    n_blocks = max(1, -(-rows // rpb))
    rpb = max(mult, _round_up(-(-rows // n_blocks), mult))
    return int(rpb)


def encoder_layer_norm(x, alpha, bias, *, eps=1e-6, rows_per_block=None,
                       target_block_bytes=None, min_grid_steps=4,
                       use_mxu_reduce=None, donate_input=False):
    """Apply the Encoder's final LayerNormalization via a Pallas kernel.

    x:     (..., D) float array
    alpha: (1,) scalar scale
    bias:  (1,) scalar shift
    """
    orig_shape = x.shape
    d = int(orig_shape[-1])
    rows = 1
    for s in orig_shape[:-1]:
        rows *= int(s)
    x2 = x.reshape(rows, d)

    itemsize = jnp.dtype(x.dtype).itemsize
    mult = {4: 8, 2: 16, 1: 32}.get(itemsize, 8)   # sublane packing

    vmem_cap = _vmem_capacity_bytes()
    if target_block_bytes is None:
        # ~VMEM/20 per (f32) block: ≈3 MiB on v7x (64 MiB VMEM), ≈6.4 MiB on
        # v5e/v6e (128 MiB VMEM); pipeline footprint stays < VMEM/2.
        target_block_bytes = max(1 << 20, min(8 << 20, vmem_cap // 20))
    if rows_per_block is None:
        rows_per_block = _choose_rows_per_block(
            rows, d, target_block_bytes, mult, min_grid_steps)
    if use_mxu_reduce is None:
        use_mxu_reduce = d <= 256   # XLU is the binding slot only for small d

    num_blocks = int(pl.cdiv(rows, rows_per_block))
    grid = (num_blocks,)

    # Real pipeline footprint: double-buffered input + output blocks plus the
    # f32 upcast / centered / squared temporaries, plus slack; capped at half
    # of physical VMEM (≈32 MiB on v7x, ≈64 MiB on v5e/v6e).  The explicit
    # limit matters on v5e where the default scoped limit is only 16 MiB.
    block_in_bytes = rows_per_block * d * itemsize
    block_f32_bytes = rows_per_block * d * 4
    footprint = 4 * block_in_bytes + 3 * block_f32_bytes
    vmem_limit = int(min(vmem_cap // 2, footprint + (8 << 20)))

    kwargs = {}
    if donate_input:
        # In-place x -> out aliasing (no second rows x d HBM buffer).  Safe
        # for any shape now that the wrapper never pads.
        kwargs["input_output_aliases"] = {2: 0}

    out = pl.pallas_call(
        functools.partial(_encoder_norm_kernel, eps=eps,
                          use_mxu_reduce=use_mxu_reduce),
        out_shape=jax.ShapeDtypeStruct((rows, d), x.dtype),
        grid_spec=pltpu.PrefetchScalarGridSpec(
            num_scalar_prefetch=0,
            grid=grid,
            in_specs=[
                pl.BlockSpec(memory_space=pltpu.MemorySpace.SMEM),  # alpha (1,)
                pl.BlockSpec(memory_space=pltpu.MemorySpace.SMEM),  # bias  (1,)
                pl.BlockSpec((rows_per_block, d), lambda i: (i, 0)),
            ],
            out_specs=pl.BlockSpec((rows_per_block, d), lambda i: (i, 0)),
        ),
        compiler_params=pltpu.CompilerParams(
            dimension_semantics=("parallel",),
            vmem_limit_bytes=vmem_limit,
        ),
        **kwargs,
    )(alpha, bias, x2)

    return out.reshape(orig_shape)


def encoder_forward(x, layers=(), mask=None, *, alpha=None, bias=None, eps=1e-6):
    """Forward pass of Encoder: apply each layer, then LayerNormalization."""
    for layer in layers:
        x = layer(x, mask)
    return encoder_layer_norm(x, alpha, bias, eps=eps)


def _reference_forward(x, layers=(), mask=None, *, alpha, bias, eps=1e-6):
    """Pure-JAX reference matching the PyTorch semantics."""
    for layer in layers:
        x = layer(x, mask)
    x32 = x.astype(jnp.float32)
    mean = jnp.mean(x32, axis=-1, keepdims=True)
    std = jnp.std(x32, axis=-1, keepdims=True, ddof=1)
    return (alpha[0] * (x32 - mean) / (std + eps) + bias[0]).astype(x.dtype)


if __name__ == "__main__":
    key = jax.random.PRNGKey(0)
    k1, k2, k3 = jax.random.split(key, 3)

    # Small shapes consistent with a transformer Encoder; d_model multiple of
    # 128 so output stores are lane-dense unmasked vst (as real BERT/ViT
    # widths are).
    batch, seq, d_model = 2, 8, 128
    x = jax.random.normal(k1, (batch, seq, d_model), dtype=jnp.float32)

    # nn.Parameter(torch.ones(1)) / nn.Parameter(torch.zeros(1)).
    alpha = jnp.ones((1,), dtype=jnp.float32)
    bias = jnp.zeros((1,), dtype=jnp.float32)

    # TODO(synk): no EncoderBlock definition was provided; the Encoder layer
    # loop degenerates to identity before the final norm.
    layers = ()

    out = encoder_forward(x, layers, mask=None, alpha=alpha, bias=bias)
    out = jax.block_until_ready(out)
    ref = _reference_forward(x, layers, mask=None, alpha=alpha, bias=bias)
    assert out.shape == x.shape
    assert jnp.allclose(out, ref, atol=1e-4, rtol=1e-4), "mismatch vs reference"

    # Ragged-row path (15 rows -> partial last block, no wrapper padding) with
    # a large mean offset to exercise the two-pass numerics.
    x_odd = jax.random.normal(k2, (3, 5, d_model), dtype=jnp.float32) * 0.1 + 10.0
    out_odd = jax.block_until_ready(encoder_layer_norm(x_odd, alpha, bias))
    ref_odd = _reference_forward(x_odd, (), None, alpha=alpha, bias=bias)
    assert out_odd.shape == x_odd.shape
    assert jnp.allclose(out_odd, ref_odd, atol=1e-4, rtol=1e-4), "ragged mismatch"

    # Larger d_model exercises the XLU (jnp.sum) reduction path.
    x_wide = jax.random.normal(k3, (2, 8, 512), dtype=jnp.float32)
    out_wide = jax.block_until_ready(encoder_layer_norm(x_wide, alpha, bias))
    ref_wide = _reference_forward(x_wide, (), None, alpha=alpha, bias=bias)
    assert jnp.allclose(out_wide, ref_wide, atol=1e-4, rtol=1e-4), "wide mismatch"

    print("KERNEL_OK")
</pallas_src>

<mosaic_0001>
module attributes {stable_mosaic.version = 11 : i64} {
  func.func @_encoder_norm_kernel(%arg0: i32, %arg1: memref<1xf32, #tpu.memory_space<smem>>, %arg2: memref<1xf32, #tpu.memory_space<smem>>, %arg3: memref<8x128xf32, #tpu.memory_space<vmem>>, %arg4: memref<8x128xf32, #tpu.memory_space<vmem>>) attributes {dimension_semantics = [#tpu.dimension_semantics<parallel>], iteration_bounds = array<i64: 2>, scalar_prefetch = 0 : i64, scratch_operands = 0 : i64, tpu.core_type = #tpu.core_type<tc>, window_params = [{transform_indices = @transform_0, window_bounds = array<i64: 1>}, {transform_indices = @transform_1, window_bounds = array<i64: 1>}, {transform_indices = @transform_2, window_bounds = array<i64: 8, 128>}, {transform_indices = @transform_3, window_bounds = array<i64: 8, 128>}]} {
    %c0 = arith.constant 0 : index
    %c0_0 = arith.constant 0 : index
    %0 = vector.load %arg3[%c0, %c0_0] : memref<8x128xf32, #tpu.memory_space<vmem>>, vector<8x128xf32>
    %cst = arith.constant 1.000000e+00 : f32
    %1 = vector.broadcast %cst : f32 to vector<128x1xf32>
    %cst_1 = arith.constant dense<0.000000e+00> : vector<8x1xf32>
    %2 = tpu.matmul %0, %1, %cst_1 {dimension_numbers = #tpu.dot_dimension_numbers<[1], [0], [0], [1], [0, 0, 1, 1], [], []>} : vector<8x128xf32>, vector<128x1xf32>, vector<8x1xf32> -> vector<8x1xf32>
    %cst_2 = arith.constant 7.812500e-03 : f32
    %3 = vector.broadcast %cst_2 : f32 to vector<8x1xf32>
    %4 = arith.mulf %2, %3 : vector<8x1xf32>
    %5 = vector.broadcast %4 : vector<8x1xf32> to vector<8x128xf32>
    %6 = arith.subf %0, %5 : vector<8x128xf32>
    %7 = arith.mulf %6, %6 : vector<8x128xf32>
    %cst_3 = arith.constant dense<0.000000e+00> : vector<8x1xf32>
    %8 = tpu.matmul %7, %1, %cst_3 {dimension_numbers = #tpu.dot_dimension_numbers<[1], [0], [0], [1], [0, 0, 1, 1], [], []>} : vector<8x128xf32>, vector<128x1xf32>, vector<8x1xf32> -> vector<8x1xf32>
    %cst_4 = arith.constant 0.00787401571 : f32
    %9 = vector.broadcast %cst_4 : f32 to vector<8x1xf32>
    %10 = arith.mulf %8, %9 : vector<8x1xf32>
    %11 = math.sqrt %10 : vector<8x1xf32>
    %cst_5 = arith.constant 9.99999997E-7 : f32
    %12 = vector.broadcast %cst_5 : f32 to vector<8x1xf32>
    %13 = arith.addf %11, %12 : vector<8x1xf32>
    %14 = tpu.reciprocal %13 {approx = true} : vector<8x1xf32> -> vector<8x1xf32>
    %15 = arith.mulf %13, %14 : vector<8x1xf32>
    %cst_6 = arith.constant 2.000000e+00 : f32
    %16 = vector.broadcast %cst_6 : f32 to vector<8x1xf32>
    %17 = arith.subf %16, %15 : vector<8x1xf32>
    %18 = arith.mulf %14, %17 : vector<8x1xf32>
    %19 = arith.mulf %13, %18 : vector<8x1xf32>
    %cst_7 = arith.constant 2.000000e+00 : f32
    %20 = vector.broadcast %cst_7 : f32 to vector<8x1xf32>
    %21 = arith.subf %20, %19 : vector<8x1xf32>
    %22 = arith.mulf %18, %21 : vector<8x1xf32>
    %c0_8 = arith.constant 0 : index
    %23 = memref.load %arg1[%c0_8] : memref<1xf32, #tpu.memory_space<smem>>
    %24 = vector.broadcast %23 : f32 to vector<8x1xf32>
    %25 = arith.mulf %24, %22 : vector<8x1xf32>
    %26 = vector.broadcast %25 : vector<8x1xf32> to vector<8x128xf32>
    %27 = arith.mulf %6, %26 : vector<8x128xf32>
    %c0_9 = arith.constant 0 : index
    %28 = memref.load %arg2[%c0_9] : memref<1xf32, #tpu.memory_space<smem>>
    %29 = vector.broadcast %28 : f32 to vector<8x128xf32>
    %30 = arith.addf %27, %29 : vector<8x128xf32>
    %c0_10 = arith.constant 0 : index
    %c0_11 = arith.constant 0 : index
    %31 = vector.load %arg4[%c0_10, %c0_11] : memref<8x128xf32, #tpu.memory_space<vmem>>, vector<8x128xf32>
    tpu.vector_store %arg4[%c0_10, %c0_11], %30 {strides = array<i32>} : memref<8x128xf32, #tpu.memory_space<vmem>>, vector<8x128xf32>,
    return
  }
  func.func @transform_0(%arg0: i32) -> i32 {
    %c0_i32 = arith.constant 0 : i32
    %c0_i32_0 = arith.constant 0 : i32
    return %c0_i32 : i32
  }
  func.func @transform_1(%arg0: i32) -> i32 {
    %c0_i32 = arith.constant 0 : i32
    %c0_i32_0 = arith.constant 0 : i32
    return %c0_i32 : i32
  }
  func.func @transform_2(%arg0: i32) -> (i32, i32) {
    %c0_i32 = arith.constant 0 : i32
    %c0_i32_0 = arith.constant 0 : i32
    return %arg0, %c0_i32 : i32, i32
  }
  func.func @transform_3(%arg0: i32) -> (i32, i32) {
    %c0_i32 = arith.constant 0 : i32
    %c0_i32_0 = arith.constant 0 : i32
    return %arg0, %c0_i32 : i32, i32
  }
}

</mosaic_0001>

<llo_original>
// kernel: tpu_custom_call.1
$region0: #{tpu_custom_call.1}
  #allocation0 [shape = 'u32[]', space=smem, size = 0x4, offset = 0x4, fixed_abs, tag = 'smem constant byte address 0x4 - core index']
  #allocation1 [shape = 'u32[144,128]{1,0:T(1,128)}', space=vmem, size = 0x12000, scoped, tag = 'internal scratch']
  #allocation2 [shape = 'f32[1]{0:T(128)S(6)}', space=smem, size = 0x200, scoped, tag = 'scoped memory for tpu_custom_call.1']
  #allocation3 [shape = 'f32[1]{0:T(128)S(6)}', space=smem, size = 0x200, scoped, tag = 'scoped memory for tpu_custom_call.1']
  %s0 = inlined_call_operand.<no memory space> [shape: f32[1], index: 0, kind: input, shape index: {}]
  %s1 = inlined_call_operand.<no memory space> [shape: f32[1], index: 1, kind: input, shape index: {}]
  %s2 = inlined_call_operand.hbm [shape: f32[16,128], index: 2, kind: input, shape index: {}]
  %s3 = inlined_call_operand.hbm [shape: f32[16,128], index: 3, kind: output, shape index: {}]
  %s4 = sld [smem:[#allocation0]]
  $region49: #{tpu_custom_call.1} parent=0
    _
  %s6 = ssub.s32 1, %s4
  %s7 = scalar_select 0, %s6, %s4
  %8 = sst [smem:[#allocation2]] %s0
  %9 = sst [smem:[#allocation3]] %s1
  $region1: #{tpu_custom_call.1} parent=0
    #allocation4 [shape = 'u8[8192]{0}', space=vmem, size = 0x2000, scoped, tag = 'input window, operand 2']
    #allocation5 [shape = 's32[2]{0}', space=sflag, size = 0x8, scoped, tag = 'scoped memory for tpu_custom_call.1']
    #allocation6 [shape = 's32[2]{0}', space=sflag, size = 0x8, scoped, tag = 'scoped memory for tpu_custom_call.1']
    #allocation7 [shape = 'u8[8192]{0}', space=vmem, size = 0x2000, scoped, tag = 'output window, operand 0']
    %10 = vsyncpa [#allocation5], 0
    %s11 = scalar_lea.sflag [#allocation5], 1
    %12 = vsyncpa %s11, 0
    %13 = vsyncpa [#allocation6], 0
    %s14 = scalar_lea.sflag [#allocation6], 1
    %15 = vsyncpa %s14, 0
    loop: start=0, step=1, limit=4
    $region2: #{tpu_custom_call.1} parent=1 // loop_pre_header
      _
    $region3: #{tpu_custom_call.1} parent=1 // loop_header
      %s17 = sphi 0, %s21
      %p18 = scmp.ge.s32.totalorder %s17, 4
      %s25 = sphi 0, %s25
      %s27 = sphi 0, %s25
      %s28 = sphi 0, %s27
      %s42 = sphi 0, %s28
      %s46 = sphi 0, %s46
      %s48 = sphi 0, %s46
      %s49 = sphi 0, %s48
      %s63 = sphi 0, %s49
      %s69 = sphi 0, %s71
      %s72 = sphi 0, %s69
      %s73 = sphi 0, %s72
      %s89 = sphi 0, %s73
      %s95 = sphi 0, %s97
      %s98 = sphi 0, %s95
      %s99 = sphi 0, %s98
      %s115 = sphi 0, %s99
    $region4: #{tpu_custom_call.1} parent=1 // loop_header_branch
      %20 = sbr.rel (%p18) target = $region8
    $region5: #{tpu_custom_call.1} parent=1 // loop_body
      %s22 = ssub.s32 %s17, 1
      %s23 = ssub.s32 %s17, 2
      %s24 = sadd.s32 %s17, 1
      %s26 = sadd.s32 %s25, 1
      %p29 = scmp.eq.s32.totalorder %s17, 1
      %p30 = scmp.ne.s32.totalorder %s25, %s27
      %p31 = scmp.eq.s32.totalorder %s17, 0
      %p32 = por %p30, %p31
      %p33 = scmp.ne.s32.totalorder %s25, %s27
      %p34 = scmp.eq.s32.totalorder %s22, 1
      %p35 = por %p33, %p34
      %p36 = scmp.ne.s32.totalorder %s27, %s28
      %p37 = scmp.eq.s32.totalorder %s22, 0
      %p38 = por %p36, %p37
      %p39 = scmp.ne.s32.totalorder %s27, %s28
      %p40 = scmp.eq.s32.totalorder %s23, 1
      %p41 = por %p39, %p40
      %p43 = scmp.ne.s32.totalorder %s28, %s42
      %p44 = scmp.eq.s32.totalorder %s23, 0
      %p45 = por %p43, %p44
      %s47 = sadd.s32 %s46, 1
      %p50 = scmp.eq.s32.totalorder %s17, 1
      %p51 = scmp.ne.s32.totalorder %s46, %s48
      %p52 = scmp.eq.s32.totalorder %s17, 0
      %p53 = por %p51, %p52
      %p54 = scmp.ne.s32.totalorder %s46, %s48
      %p55 = scmp.eq.s32.totalorder %s22, 1
      %p56 = por %p54, %p55
      %p57 = scmp.ne.s32.totalorder %s48, %s49
      %p58 = scmp.eq.s32.totalorder %s22, 0
      %p59 = por %p57, %p58
      %p60 = scmp.ne.s32.totalorder %s48, %s49
      %p61 = scmp.eq.s32.totalorder %s23, 1
      %p62 = por %p60, %p61
      %p64 = scmp.ne.s32.totalorder %s49, %s63
      %p65 = scmp.eq.s32.totalorder %s23, 0
      %p66 = por %p64, %p65
      %s67 = ssub.s32 %s17, %s24
      %p68 = scmp.eq.s32.totalorder %s67, 0
      %s70 = sadd.s32 %s69, 1
      %s71 = scalar_select %p68, %s69, %s70
      %p74 = pneg %p68
      %p75 = scmp.eq.s32.totalorder %s17, 1
      %p76 = por %p74, %p75
      %p77 = scmp.ne.s32.totalorder %s69, %s72
      %p78 = scmp.eq.s32.totalorder %s17, 0
      %p79 = por %p77, %p78
      %p80 = scmp.ne.s32.totalorder %s69, %s72
      %p81 = scmp.eq.s32.totalorder %s22, 1
      %p82 = por %p80, %p81
      %p83 = scmp.ne.s32.totalorder %s72, %s73
      %p84 = scmp.eq.s32.totalorder %s22, 0
      %p85 = por %p83, %p84
      %p86 = scmp.ne.s32.totalorder %s72, %s73
      %p87 = scmp.eq.s32.totalorder %s23, 1
      %p88 = por %p86, %p87
      %p90 = scmp.ne.s32.totalorder %s73, %s89
      %p91 = scmp.eq.s32.totalorder %s23, 0
      %p92 = por %p90, %p91
      %s93 = ssub.s32 %s17, %s24
      %p94 = scmp.eq.s32.totalorder %s93, 0
      %s96 = sadd.s32 %s95, 1
      %s97 = scalar_select %p94, %s95, %s96
      %p100 = pneg %p94
      %p101 = scmp.eq.s32.totalorder %s17, 1
      %p102 = por %p100, %p101
      %p103 = scmp.ne.s32.totalorder %s95, %s98
      %p104 = scmp.eq.s32.totalorder %s17, 0
      %p105 = por %p103, %p104
      %p106 = scmp.ne.s32.totalorder %s95, %s98
      %p107 = scmp.eq.s32.totalorder %s22, 1
      %p108 = por %p106, %p107
      %p109 = scmp.ne.s32.totalorder %s98, %s99
      %p110 = scmp.eq.s32.totalorder %s22, 0
      %p111 = por %p109, %p110
      %p112 = scmp.ne.s32.totalorder %s98, %s99
      %p113 = scmp.eq.s32.totalorder %s23, 1
      %p114 = por %p112, %p113
      %p116 = scmp.ne.s32.totalorder %s99, %s115
      %p117 = scmp.eq.s32.totalorder %s23, 0
      %p118 = por %p116, %p117
      %p119 = scmp.le.s32.totalorder 1, %s17
      %p120 = scmp.lt.s32.totalorder %s17, 3
      %p121 = pnand %p119, %p120
      %p122 = pneg %p121
      // Predicated region
      $region9: #{tpu_custom_call.1} parent=5 // pred_check
        _
      $region10: #{tpu_custom_call.1} parent=5 // pred_check_branch
        %124 = sbr.rel (%p121) target = $region12
      $region11: #{tpu_custom_call.1} parent=5 // pred_region
        %s125 = ssub.s32 %s17, 1
        // Predicated region
        $region13: #{tpu_custom_call.1} parent=11 // pred_check
          %p126 = pneg %p38
        $region14: #{tpu_custom_call.1} parent=11 // pred_check_branch
          %128 = sbr.rel (%p126) target = $region16
        $region15: #{tpu_custom_call.1} parent=11 // pred_region
          _
        $region16: #{tpu_custom_call.1} parent=11 // pred_fallthru
          _
        // Predicated region
        $region17: #{tpu_custom_call.1} parent=11 // pred_check
          %p129 = pneg %p59
        $region18: #{tpu_custom_call.1} parent=11 // pred_check_branch
          %131 = sbr.rel (%p129) target = $region20
        $region19: #{tpu_custom_call.1} parent=11 // pred_region
          _
        $region20: #{tpu_custom_call.1} parent=11 // pred_fallthru
          _
      $region12: #{tpu_custom_call.1} parent=5 // pred_fallthru
        _
      %p132 = scmp.lt.s32.totalorder %s17, 2
      // Predicated region
      $region21: #{tpu_custom_call.1} parent=5 // pred_check
        %p133 = pneg %p132
      $region22: #{tpu_custom_call.1} parent=5 // pred_check_branch
        %135 = sbr.rel (%p133) target = $region24
      $region23: #{tpu_custom_call.1} parent=5 // pred_region
        // Predicated region
        $region25: #{tpu_custom_call.1} parent=23 // pred_check
          %p136 = pneg %p79
        $region26: #{tpu_custom_call.1} parent=23 // pred_check_branch
          %138 = sbr.rel (%p136) target = $region28
        $region27: #{tpu_custom_call.1} parent=23 // pred_region
          %s139 = sand.u32 %s69, 1
          %s140 = scalar_lea.sflag [#allocation5], %s139
          %s141 = sand.u32 %s69, 1
          %s142 = smul.addr %s141, 8
          %s143 = scalar_lea.vmem [#allocation4], %s142
          %s145 = ssub.s32 128, 128
          %146 = vsyncadd %s140, %s145
          %s147 = smul.addr %s17, 128
          %s148 = scalar_lea.hbm %s2, %s147
          %s150 = sshll.u32 %s143, 4
          %s151 = int_to_ptr.vmem [resolvable:$true] %s150
          %153 = dma.hbm_to_vmem [thread:$0]  %s148, 128, %s151, %s140
        $region28: #{tpu_custom_call.1} parent=23 // pred_fallthru
          _
      $region24: #{tpu_custom_call.1} parent=5 // pred_fallthru
        _
      %p154 = scmp.le.s32.totalorder 1, %s17
      %p155 = scmp.lt.s32.totalorder %s17, 3
      %p156 = pnand %p154, %p155
      %p157 = pneg %p156
      // Predicated region
      $region29: #{tpu_custom_call.1} parent=5 // pred_check
        _
      $region30: #{tpu_custom_call.1} parent=5 // pred_check_branch
        %159 = sbr.rel (%p156) target = $region32
      $region31: #{tpu_custom_call.1} parent=5 // pred_region
        %s160 = ssub.s32 %s17, 1
        %s161 = sand.u32 %s72, 1
        %s162 = scalar_lea.sflag [#allocation5], %s161
        %s163 = sand.u32 %s72, 1
        %s164 = smul.addr %s163, 8
        %s165 = scalar_lea.vmem [#allocation4], %s164
        // Predicated region
        $region33: #{tpu_custom_call.1} parent=31 // pred_check
          %p166 = pneg %p85
        $region34: #{tpu_custom_call.1} parent=31 // pred_check_branch
          %168 = sbr.rel (%p166) target = $region36
        $region35: #{tpu_custom_call.1} parent=31 // pred_region
          %169 = dma.done %s162, 128
        $region36: #{tpu_custom_call.1} parent=31 // pred_fallthru
          _
        %p170 = pneg %p38
        %p171 = pneg %p35
        %p172 = pneg %p59
        %p173 = pneg %p56
        %s174 = sand.u32 %s72, 1
        %s175 = scalar_lea.sflag [#allocation5], %s174
        %s176 = sand.u32 %s72, 1
        %s177 = smul.addr %s176, 8
        %s178 = scalar_lea.vmem [#allocation4], %s177
        %p179 = pneg %p85
        %p180 = pneg %p82
        %p181 = pneg %p111
        %p182 = pneg %p108
        %s183 = sand.u32 %s98, 1
        %s184 = scalar_lea.sflag [#allocation6], %s183
        %s185 = sand.u32 %s98, 1
        %s186 = smul.addr %s185, 8
        %s187 = scalar_lea.vmem [#allocation7], %s186
        %v188 = vld [vmem:[%s165] sm:$0xff]
        %189 = vmatprep.subr.mxu0 0.0
        %190 = vmatpush1.msra.mxu0 1.0
        %191 = vmatprep.subr.mxu0 0.0
        %192 = vmatpush1.msra.mxu0 1.0
        %193 = vmatprep.subr.mxu0 0.0
        %194 = vmatpush1.msra.mxu0 1.0
        %195 = vmatprep.subr.mxu0 0.0
        %196 = vmatpush1.msra.mxu0 1.0
        %197 = vmatprep.subr.mxu0 0.0
        %198 = vmatpush1.msra.mxu0 1.0
        %199 = vmatprep.subr.mxu0 0.0
        %200 = vmatpush1.msra.mxu0 1.0
        %201 = vmatprep.subr.mxu0 0.0
        %202 = vmatpush1.msra.mxu0 1.0
        %203 = vmatprep.subr.mxu0 0.0
        %204 = vmatpush1.msra.mxu0 1.0
        %205 = vmatprep.subr.mxu0 0.0
        %206 = vmatpush1.msra.mxu0 1.0
        %207 = vmatprep.subr.mxu0 0.0
        %208 = vmatpush1.msra.mxu0 1.0
        %209 = vmatprep.subr.mxu0 0.0
        %210 = vmatpush1.msra.mxu0 1.0
        %211 = vmatprep.subr.mxu0 0.0
        %212 = vmatpush1.msra.mxu0 1.0
        %213 = vmatprep.subr.mxu0 0.0
        %214 = vmatpush1.msra.mxu0 1.0
        %215 = vmatprep.subr.mxu0 0.0
        %216 = vmatpush1.msra.mxu0 1.0
        %217 = vmatprep.subr.mxu0 0.0
        %218 = vmatpush1.msra.mxu0 1.0
        %219 = vmatprep.subr.mxu0 0.0
        %220 = vmatpush1.msra.mxu0 1.0
        %221 = vmatprep.subr.mxu0 0.0
        %222 = vmatpush1.msra.mxu0 0.0
        %223 = vmatprep.subr.mxu0 0.0
        %224 = vmatpush1.msra.mxu0 0.0
        %225 = vmatprep.subr.mxu0 0.0
        %226 = vmatpush1.msra.mxu0 0.0
        %227 = vmatprep.subr.mxu0 0.0
        %228 = vmatpush1.msra.mxu0 0.0
        %229 = vmatprep.subr.mxu0 0.0
        %230 = vmatpush1.msra.mxu0 0.0
        %231 = vmatprep.subr.mxu0 0.0
        %232 = vmatpush1.msra.mxu0 0.0
        %233 = vmatprep.subr.mxu0 0.0
        %234 = vmatpush1.msra.mxu0 0.0
        %235 = vmatprep.subr.mxu0 0.0
        %236 = vmatpush1.msra.mxu0 0.0
        %237 = vmatprep.subr.mxu0 0.0
        %238 = vmatpush1.msra.mxu0 0.0
        %239 = vmatprep.subr.mxu0 0.0
        %240 = vmatpush1.msra.mxu0 0.0
        %241 = vmatprep.subr.mxu0 0.0
        %242 = vmatpush1.msra.mxu0 0.0
        %243 = vmatprep.subr.mxu0 0.0
        %244 = vmatpush1.msra.mxu0 0.0
        %245 = vmatprep.subr.mxu0 0.0
        %246 = vmatpush1.msra.mxu0 0.0
        %247 = vmatprep.subr.mxu0 0.0
        %248 = vmatpush1.msra.mxu0 0.0
        %249 = vmatprep.subr.mxu0 0.0
        %250 = vmatpush1.msra.mxu0 0.0
        %251 = vmatprep.subr.mxu0 0.0
        %252 = vmatpush1.msra.mxu0 0.0
        %253 = vmatprep.mubr.f32.mxu0 0.0
        %254 = vmatmul.mubr.f32.gmra.mrb[0].mxu0 %v188
        %v255 = vpop.f32.mrb[0].mxu0
        %v256 = vadd.f32 0.0, %v255
        %v257 = vpop.f32.mrb[0].mxu0
        %258 = vdwg.mxu0
        %v259 = vmul.f32 %v256, 0.0078125
        %261 = vset.pattern.permute.xlu0 0
        %262 = vperm.xlu0 %261, %v259
        %v263 = vpop.permute.xlu0 %262
        %v265 = vsub.f32 %v188, %v263
        %v266 = vmul.f32 %v265, %v265
        %267 = vmatprep.subr.mxu0 0.0
        %268 = vmatpush1.msra.mxu0 1.0
        %269 = vmatprep.subr.mxu0 0.0
        %270 = vmatpush1.msra.mxu0 1.0
        %271 = vmatprep.subr.mxu0 0.0
        %272 = vmatpush1.msra.mxu0 1.0
        %273 = vmatprep.subr.mxu0 0.0
        %274 = vmatpush1.msra.mxu0 1.0
        %275 = vmatprep.subr.mxu0 0.0
        %276 = vmatpush1.msra.mxu0 1.0
        %277 = vmatprep.subr.mxu0 0.0
        %278 = vmatpush1.msra.mxu0 1.0
        %279 = vmatprep.subr.mxu0 0.0
        %280 = vmatpush1.msra.mxu0 1.0
        %281 = vmatprep.subr.mxu0 0.0
        %282 = vmatpush1.msra.mxu0 1.0
        %283 = vmatprep.subr.mxu0 0.0
        %284 = vmatpush1.msra.mxu0 1.0
        %285 = vmatprep.subr.mxu0 0.0
        %286 = vmatpush1.msra.mxu0 1.0
        %287 = vmatprep.subr.mxu0 0.0
        %288 = vmatpush1.msra.mxu0 1.0
        %289 = vmatprep.subr.mxu0 0.0
        %290 = vmatpush1.msra.mxu0 1.0
        %291 = vmatprep.subr.mxu0 0.0
        %292 = vmatpush1.msra.mxu0 1.0
        %293 = vmatprep.subr.mxu0 0.0
        %294 = vmatpush1.msra.mxu0 1.0
        %295 = vmatprep.subr.mxu0 0.0
        %296 = vmatpush1.msra.mxu0 1.0
        %297 = vmatprep.subr.mxu0 0.0
        %298 = vmatpush1.msra.mxu0 1.0
        %299 = vmatprep.subr.mxu0 0.0
        %300 = vmatpush1.msra.mxu0 0.0
        %301 = vmatprep.subr.mxu0 0.0
        %302 = vmatpush1.msra.mxu0 0.0
        %303 = vmatprep.subr.mxu0 0.0
        %304 = vmatpush1.msra.mxu0 0.0
        %305 = vmatprep.subr.mxu0 0.0
        %306 = vmatpush1.msra.mxu0 0.0
        %307 = vmatprep.subr.mxu0 0.0
        %308 = vmatpush1.msra.mxu0 0.0
        %309 = vmatprep.subr.mxu0 0.0
        %310 = vmatpush1.msra.mxu0 0.0
        %311 = vmatprep.subr.mxu0 0.0
        %312 = vmatpush1.msra.mxu0 0.0
        %313 = vmatprep.subr.mxu0 0.0
        %314 = vmatpush1.msra.mxu0 0.0
        %315 = vmatprep.subr.mxu0 0.0
        %316 = vmatpush1.msra.mxu0 0.0
        %317 = vmatprep.subr.mxu0 0.0
        %318 = vmatpush1.msra.mxu0 0.0
        %319 = vmatprep.subr.mxu0 0.0
        %320 = vmatpush1.msra.mxu0 0.0
        %321 = vmatprep.subr.mxu0 0.0
        %322 = vmatpush1.msra.mxu0 0.0
        %323 = vmatprep.subr.mxu0 0.0
        %324 = vmatpush1.msra.mxu0 0.0
        %325 = vmatprep.subr.mxu0 0.0
        %326 = vmatpush1.msra.mxu0 0.0
        %327 = vmatprep.subr.mxu0 0.0
        %328 = vmatpush1.msra.mxu0 0.0
        %329 = vmatprep.subr.mxu0 0.0
        %330 = vmatpush1.msra.mxu0 0.0
        %331 = vmatprep.mubr.f32.mxu0 0.0
        %332 = vmatmul.mubr.f32.gmra.mrb[0].mxu0 %v266
        %v333 = vpop.f32.mrb[0].mxu0
        %v334 = vadd.f32 0.0, %v333
        %v335 = vpop.f32.mrb[0].mxu0
        %336 = vdwg.mxu0
        %v337 = vmul.f32 %v334, 0.007874016
        %v338 = vrsqrt.pop %v337
        %v339 = vmul.f32 %v337, %v338
        %vm340 = vcmp.eq.f32.partialorder %v337, inf
        %v341 = vsel %vm340, %v337, %v339
        %vm342 = vcmp.eq.f32.partialorder %v337, 0.0
        %v343 = vand.u32 %v337, 2147483648
        %v344 = vsel %vm342, %v343, %v341
        %v345 = vadd.f32 %v344, 1e-06
        %v346 = vrcp.pop %v345
        %v347 = vmul.f32 %v345, %v346
        %v348 = vsub.f32 2.0, %v347
        %v349 = vmul.f32 %v346, %v348
        %v350 = vmul.f32 %v345, %v349
        %v351 = vsub.f32 2.0, %v350
        %v352 = vmul.f32 %v349, %v351
        %s353 = sld [smem:[#allocation2]]
        %v354 = vstv %s353
        %v355 = vmul.f32 %v354, %v352
        %357 = vset.pattern.permute.xlu0 0
        %358 = vperm.xlu0 %357, %v355
        %v359 = vpop.permute.xlu0 %358
        %v361 = vmul.f32 %v265, %v359
        %s362 = sld [smem:[#allocation3]]
        %v363 = vstv %s362
        %v364 = vadd.f32 %v361, %v363
        %365 = vst [vmem:[%s187] sm:$0xff] %v364
        %s366 = sand.u32 %s98, 1
        %s367 = scalar_lea.sflag [#allocation6], %s366
        %s368 = sand.u32 %s98, 1
        %s369 = smul.addr %s368, 8
        %s370 = scalar_lea.vmem [#allocation7], %s369
        // Predicated region
        $region37: #{tpu_custom_call.1} parent=31 // pred_check
          %p371 = pneg %p108
        $region38: #{tpu_custom_call.1} parent=31 // pred_check_branch
          %373 = sbr.rel (%p371) target = $region40
        $region39: #{tpu_custom_call.1} parent=31 // pred_region
          %s375 = ssub.s32 128, 128
          %376 = vsyncadd %s367, %s375
          %s377 = smul.addr %s22, 128
          %s378 = scalar_lea.hbm %s3, %s377
          %s380 = sshll.u32 %s370, 4
          %s381 = int_to_ptr.vmem [resolvable:$true] %s380
          %383 = dma.vmem_to_hbm [thread:$0]  %s381, 128, %s378, %s367
        $region40: #{tpu_custom_call.1} parent=31 // pred_fallthru
          _
      $region32: #{tpu_custom_call.1} parent=5 // pred_fallthru
        _
      %p384 = scmp.le.s32.totalorder 2, %s17
      // Predicated region
      $region41: #{tpu_custom_call.1} parent=5 // pred_check
        %p385 = pneg %p384
      $region42: #{tpu_custom_call.1} parent=5 // pred_check_branch
        %387 = sbr.rel (%p385) target = $region44
      $region43: #{tpu_custom_call.1} parent=5 // pred_region
        %s388 = ssub.s32 %s17, 2
        // Predicated region
        $region45: #{tpu_custom_call.1} parent=43 // pred_check
          %p389 = pneg %p114
        $region46: #{tpu_custom_call.1} parent=43 // pred_check_branch
          %391 = sbr.rel (%p389) target = $region48
        $region47: #{tpu_custom_call.1} parent=43 // pred_region
          %s392 = sand.u32 %s99, 1
          %s393 = scalar_lea.sflag [#allocation6], %s392
          %s394 = sand.u32 %s99, 1
          %s395 = smul.addr %s394, 8
          %s396 = scalar_lea.vmem [#allocation7], %s395
          %397 = dma.done %s393, 128
        $region48: #{tpu_custom_call.1} parent=43 // pred_fallthru
          _
      $region44: #{tpu_custom_call.1} parent=5 // pred_fallthru
        _
    $region6: #{tpu_custom_call.1} parent=1 // loop_footer
      %s21 = sadd.s32 1, %s17
    $region7: #{tpu_custom_call.1} parent=1 // loop_footer_branch
      %16 = sbr.rel target = $region3
    $region8: #{tpu_custom_call.1} parent=1 // loop_exit
      _
    %398 = vsyncpa [#allocation5], 1
    %s399 = scalar_lea.sflag [#allocation5], 1
    %400 = vsyncpa %s399, 1
    %401 = vsyncpa [#allocation6], 1
    %s402 = scalar_lea.sflag [#allocation6], 1
    %403 = vsyncpa %s402, 1

</llo_original>
